<compile_context>
chip_gen: v6e
topology: v6e:2x2x1
jax: 0.10.0
libtpu: 0.0.40
codegen_flags: <defaults>
</compile_context>

<pallas_src>
import functools

import jax
import jax.numpy as jnp
from jax import lax
from jax.experimental import pallas as pl
from jax.experimental.pallas import tpu as pltpu


# ----------------------------------------------------------------------------
# BatchNorm (inference) fusion helper
# ----------------------------------------------------------------------------
def fuse_bn(gamma, beta, mean, var, eps=1e-5):
    scale = gamma / jnp.sqrt(var + eps)
    shift = beta - mean * scale
    return scale, shift


def _vmem_capacity_bytes():
    try:
        info = pltpu.get_tpu_info()
        for attr in ("vmem_capacity_bytes", "vmem_bytes", "vmem_size_bytes"):
            v = getattr(info, attr, None)
            if v:
                return int(v)
    except Exception:
        pass
    return 128 * 1024 * 1024


# ----------------------------------------------------------------------------
# Kernel 1: global average pool + 1x1 conv + BN + ReLU (image branch).
# Reads the bf16 input once, accumulates the row sums in f32; the last row
# tile finalizes the (1, R) image feature.  grid = (N, n_row_tiles).
# ----------------------------------------------------------------------------
def _pool_img_kernel(x_ref, w_ref, shift_ref, out_ref, acc_ref, *, inv_hw):
    i = pl.program_id(1)

    @pl.when(i == 0)
    def _():
        acc_ref[...] = jnp.zeros_like(acc_ref)

    x = x_ref[...].astype(jnp.float32)                       # (TH, W, Cin)
    acc_ref[...] += jnp.sum(x, axis=(0, 1)).reshape(acc_ref.shape)

    @pl.when(i == pl.num_programs(1) - 1)
    def _():
        pooled = acc_ref[...] * inv_hw                       # (1, Cin)
        y = jnp.dot(pooled, w_ref[...], preferred_element_type=jnp.float32)
        y = jnp.maximum(y + shift_ref[...], 0.0)             # (1, R)
        out_ref[...] = y.reshape(out_ref.shape).astype(out_ref.dtype)


# ----------------------------------------------------------------------------
# Kernel 2: all conv branches + image-feature broadcast, fused.
# grid = (N, n_row_tiles).  The once-padded bf16 input stays in HBM (pl.ANY);
# each step DMAs a halo'd row slab into a double-buffered VMEM scratch,
# computes one wide centre-tap dot + one deep-K dot per dilated branch, and
# writes five lane-dense R-wide slices of the (TH, W, 5R) output block.
# ----------------------------------------------------------------------------
def _fused_branches_kernel(*refs, maxpad, tap_offsets):
    n3 = len(tap_offsets)
    n_tapw = sum(1 for offs in tap_offsets if len(offs) > 0)
    xpad_hbm, wc_ref, shift_ref, img_ref = refs[0:4]
    tap_refs = refs[4:4 + n_tapw]
    out_ref = refs[4 + n_tapw]
    xbuf = refs[4 + n_tapw + 1]
    sem = refs[4 + n_tapw + 2]

    n = pl.program_id(0)
    i = pl.program_id(1)
    n_tiles = pl.num_programs(1)

    TH, W, _ = out_ref.shape
    THp = xbuf.shape[1]
    Cin = wc_ref.shape[0]
    R = img_ref.shape[-1]
    M = TH * W

    def x_copy(tile_idx, slot):
        return pltpu.make_async_copy(
            xpad_hbm.at[n, pl.ds(tile_idx * TH, THp)],       # halo'd row slab
            xbuf.at[slot],
            sem.at[slot])

    slot = i % 2

    # Prime the double buffer at the first row tile of each batch element
    # (safe if the batch axis gets megacore-sharded).
    @pl.when(i == 0)
    def _():
        x_copy(0, 0).start()

    # Issue the NEXT slab's DMA before blocking on the current one so the two
    # transfers overlap (review item: shortens exposed DMA per step).
    @pl.when(i + 1 < n_tiles)
    def _():
        x_copy(i + 1, 1 - slot).start()

    x_copy(i, slot).wait()

    def patch(oy, ox):
        # (TH, W, Cin) window flattened for a 2-D MXU dot.
        return xbuf[slot, oy:oy + TH, ox:ox + W, :].reshape(M, Cin)

    # The 1x1 branch and the centre taps of all dilated 3x3 branches share the
    # same (un-shifted) window -> one wide lane-dense (Cin, (1+n3)*R) matmul.
    acc_c = jnp.dot(patch(maxpad, maxpad), wc_ref[...],
                    preferred_element_type=jnp.float32)      # (M, (1+n3)R)
    shift = shift_ref[...]                                   # (1, (1+n3)R)

    def store(j, val):
        # Per-branch lane-dense store (128-lane multiple) — no concat epilogue.
        out_ref[:, :, j * R:(j + 1) * R] = (
            val.reshape(TH, W, R).astype(out_ref.dtype))

    # Image branch: global pool + 1x1 -> HxW upsample == constant broadcast.
    img = img_ref[...].astype(jnp.float32).reshape(1, R)
    store(0, jnp.broadcast_to(img, (M, R)))

    # 1x1 branch.
    store(1, jnp.maximum(acc_c[:, :R] + shift[:, :R], 0.0))

    # Dilated 3x3 branches: centre tap from acc_c plus a single deep-K dot
    # over the remaining (non-zero-halo) taps.
    t = 0
    for b in range(n3):
        acc_b = acc_c[:, (b + 1) * R:(b + 2) * R]
        offs = tap_offsets[b]
        if len(offs) > 0:
            pcat = jnp.concatenate([patch(oy, ox) for (oy, ox) in offs],
                                   axis=-1)                  # (M, n_kept*Cin)
            acc_b = acc_b + jnp.dot(pcat, tap_refs[t][...],
                                    preferred_element_type=jnp.float32)
            t += 1
        store(b + 2,
              jnp.maximum(acc_b + shift[:, (b + 1) * R:(b + 2) * R], 0.0))


# ----------------------------------------------------------------------------
# Wrappers
# ----------------------------------------------------------------------------
def aspp_forward_nhwc(x_nhwc, params, *, out_dtype=jnp.bfloat16, row_tile=None):
    N, H, W, Cin = x_nhwc.shape
    branches = params["branches"]
    w_img, bn_img = params["img"]
    R = int(w_img.shape[0])

    # ---- fold BN scale into weights, keep the shifts for the epilogue -------
    k0, _, w0, bn0 = branches[0]
    assert k0 == 1, "first branch is expected to be the 1x1 conv"
    s0, sh0 = fuse_bn(*bn0)
    center_ws = [w0.reshape(R, Cin).T * s0[None, :]]          # (Cin, R)
    shifts = [sh0]

    dil = []   # per dilated branch: list of (dyr, dxr, (Cin, R) tap weight)
    for (k, r, w_oihw, bn) in branches[1:]:
        assert k == 3, "remaining branches are expected to be 3x3 dilated"
        sc, sh = fuse_bn(*bn)
        w_hwio = jnp.transpose(w_oihw, (2, 3, 1, 0)) * sc[None, None, None, :]
        center_ws.append(w_hwio[1, 1])
        shifts.append(sh)
        taps = []
        for dy in range(3):
            for dx in range(3):
                if dy == 1 and dx == 1:
                    continue
                taps.append(((dy - 1) * int(r), (dx - 1) * int(r),
                             w_hwio[dy, dx]))
        dil.append(taps)
    n3 = len(dil)
    Ctot = (2 + n3) * R

    # ---- static zero-halo tap skipping (columns always) ---------------------
    kept = [[t for t in taps if abs(t[1]) < W] for taps in dil]

    def _maxpad(ks):
        m = 0
        for taps in ks:
            for (dyr, dxr, _) in taps:
                m = max(m, abs(dyr), abs(dxr))
        return m

    maxpad = _maxpad(kept)
    out_bytes = jnp.dtype(out_dtype).itemsize
    weight_bytes = (Cin * (1 + n3) * R * 2
                    + sum(len(t) for t in kept) * Cin * R * 2
                    + ((1 + n3) * R + R) * 4)

    budget = int(0.75 * _vmem_capacity_bytes())   # leave compiler headroom

    def bill(th, pad):
        thp, wp = th + 2 * pad, W + 2 * pad
        return (2 * thp * wp * Cin * 2            # bf16 slabs (double buffer)
                + 2 * th * W * Ctot * out_bytes   # output tile (double buffer)
                + 2 * weight_bytes                # weights (double buffer)
                + (2 << 20))                      # misc scratch headroom

    divisors = [d for d in range(1, H + 1) if H % d == 0]
    if row_tile is None:
        fitting = [d for d in divisors if bill(d, maxpad) <= budget]
        if not fitting:
            row_tile = divisors[0]
        else:
            good = [d for d in fitting if d * W >= 256 and d >= 2 * maxpad]
            row_tile = min(good) if good else max(fitting)
    else:
        row_tile = max(d for d in divisors if d <= row_tile)
    n_tiles = H // row_tile

    # In single-row-tile mode the row halo is pure padding too -> row skip.
    if n_tiles == 1:
        kept = [[t for t in taps if abs(t[0]) < H] for taps in kept]
        maxpad = _maxpad(kept)

    tap_offsets, tap_ws = [], []
    for taps in kept:
        tap_offsets.append(tuple((maxpad + dyr, maxpad + dxr)
                                 for (dyr, dxr, _) in taps))
        if taps:
            tap_ws.append(jnp.concatenate([w for (_, _, w) in taps],
                                          axis=0).astype(jnp.bfloat16))

    w_center = jnp.concatenate(center_ws, axis=-1).astype(jnp.bfloat16)
    shift_conv = jnp.concatenate(shifts, axis=-1).reshape(1, (1 + n3) * R)
    shift_conv = shift_conv.astype(jnp.float32)

    s_img, sh_img = fuse_bn(*bn_img)
    w_img_mat = (w_img.reshape(R, Cin).T * s_img[None, :]).astype(jnp.float32)
    sh_img = sh_img.reshape(1, R).astype(jnp.float32)

    x_bf = x_nhwc.astype(jnp.bfloat16)

    # ---- kernel 1: pooled image feature (bf16 read, f32 accumulate) ---------
    img_feat = pl.pallas_call(
        functools.partial(_pool_img_kernel, inv_hw=1.0 / float(H * W)),
        out_shape=jax.ShapeDtypeStruct((N, 1, R), jnp.float32),
        grid_spec=pltpu.PrefetchScalarGridSpec(
            num_scalar_prefetch=0,
            grid=(N, n_tiles),
            in_specs=[
                pl.BlockSpec((None, row_tile, W, Cin),
                             lambda n, i: (n, i, 0, 0)),
                pl.BlockSpec((Cin, R), lambda n, i: (0, 0)),
                pl.BlockSpec((1, R), lambda n, i: (0, 0)),
            ],
            out_specs=pl.BlockSpec((1, 1, R), lambda n, i: (n, 0, 0)),
            scratch_shapes=[pltpu.VMEM((1, Cin), jnp.float32)],
        ),
        compiler_params=pltpu.CompilerParams(
            dimension_semantics=("parallel", "arbitrary")),
    )(x_bf, w_img_mat, sh_img)

    # ---- kernel 2: all conv branches + image broadcast, fused ----------------
    # Pad ONCE to the (tap-skip-reduced) maximum dilation.
    # TODO(synk): for very small maps, skip the padded HBM copy entirely and
    # DMA only the valid halo intersection with scalar index math.
    xpad = jnp.pad(x_bf, ((0, 0), (maxpad, maxpad), (maxpad, maxpad), (0, 0)))
    Wp = W + 2 * maxpad
    THp = row_tile + 2 * maxpad

    in_specs = [
        pl.BlockSpec(memory_space=pl.ANY),                        # padded x
        pl.BlockSpec((Cin, (1 + n3) * R), lambda n, i: (0, 0)),   # centre taps
        pl.BlockSpec((1, (1 + n3) * R), lambda n, i: (0, 0)),     # BN shifts
        pl.BlockSpec((None, 1, R), lambda n, i: (n, 0, 0)),       # img feature
    ]
    for wmat in tap_ws:
        kb = int(wmat.shape[0])
        in_specs.append(pl.BlockSpec((kb, R), lambda n, i: (0, 0)))

    vmem_limit = int(max(32 * 1024 * 1024,
                         min(budget, bill(row_tile, maxpad) + (4 << 20))))

    out_nhwc = pl.pallas_call(
        functools.partial(_fused_branches_kernel, maxpad=maxpad,
                          tap_offsets=tuple(tap_offsets)),
        out_shape=jax.ShapeDtypeStruct((N, H, W, Ctot), out_dtype),
        grid_spec=pltpu.PrefetchScalarGridSpec(
            num_scalar_prefetch=0,
            grid=(N, n_tiles),
            in_specs=in_specs,
            out_specs=pl.BlockSpec((None, row_tile, W, Ctot),
                                   lambda n, i: (n, i, 0, 0)),
            scratch_shapes=[
                pltpu.VMEM((2, THp, Wp, Cin), jnp.bfloat16),      # halo'd slabs
                pltpu.SemaphoreType.DMA((2,)),
            ],
        ),
        compiler_params=pltpu.CompilerParams(
            dimension_semantics=("parallel", "arbitrary"),
            vmem_limit_bytes=vmem_limit),
    )(xpad, w_center, shift_conv, img_feat, *tap_ws)
    return out_nhwc


def aspp_forward(x_nchw, params, *, out_dtype=jnp.bfloat16, row_tile=None):
    # The PyTorch interface is NCHW; a full network would stay NHWC and drop
    # these boundary transposes.
    x_nhwc = jnp.transpose(x_nchw, (0, 2, 3, 1))
    out_nhwc = aspp_forward_nhwc(x_nhwc, params, out_dtype=out_dtype,
                                 row_tile=row_tile)
    return jnp.transpose(out_nhwc, (0, 3, 1, 2))


# ----------------------------------------------------------------------------
# Pure-JAX reference (matches the kernel's precision choices: bf16 inputs /
# weights with f32 accumulation; the kernel additionally rounds its output to
# bf16, covered by the test tolerance).
# ----------------------------------------------------------------------------
def ref_forward(x_nchw, params):
    N, _, H, W = x_nchw.shape
    w_img, bn_img = params["img"]
    R = w_img.shape[0]
    xb = x_nchw.astype(jnp.bfloat16).astype(jnp.float32)

    def conv_branch(w_oihw, bn, rate):
        sc, sh = fuse_bn(*bn)
        w_eff = (w_oihw * sc[:, None, None, None]
                 ).astype(jnp.bfloat16).astype(jnp.float32)
        k = w_oihw.shape[2]
        pad = rate * (k // 2)
        y = lax.conv_general_dilated(
            xb, w_eff, window_strides=(1, 1),
            padding=((pad, pad), (pad, pad)),
            rhs_dilation=(rate, rate),
            dimension_numbers=("NCHW", "OIHW", "NCHW"),
            precision=lax.Precision.HIGHEST)
        return jnp.maximum(y + sh[None, :, None, None], 0.0)

    sc_i, sh_i = fuse_bn(*bn_img)
    pooled = jnp.mean(xb, axis=(2, 3), keepdims=True)
    img = lax.conv_general_dilated(
        pooled, w_img, window_strides=(1, 1), padding=((0, 0), (0, 0)),
        dimension_numbers=("NCHW", "OIHW", "NCHW"),
        precision=lax.Precision.HIGHEST)
    img = jnp.maximum(img * sc_i[None, :, None, None]
                      + sh_i[None, :, None, None], 0.0)
    img = jnp.broadcast_to(img, (N, R, H, W))

    outs = [img]
    for (k, r, w, bn) in params["branches"]:
        outs.append(conv_branch(w, bn, r))
    return jnp.concatenate(outs, axis=1)


# ----------------------------------------------------------------------------
if __name__ == "__main__":
    # Small but lane-friendly shapes: Cin = R = 128 keeps every matmul operand
    # and every output store lane-dense.
    N, Cin, H, W = 2, 128, 16, 16
    R = 128                       # reduction_dim per branch
    rates = (6, 12, 18)           # output_stride == 16

    key = jax.random.PRNGKey(0)
    keys = jax.random.split(key, 16)
    x_nchw = jax.random.normal(keys[0], (N, Cin, H, W), jnp.float32)

    def bn_params(k):
        k1, k2, k3, k4 = jax.random.split(k, 4)
        gamma = 1.0 + 0.1 * jax.random.normal(k1, (R,), jnp.float32)
        beta = 0.1 * jax.random.normal(k2, (R,), jnp.float32)
        mean = 0.1 * jax.random.normal(k3, (R,), jnp.float32)
        var = jnp.abs(1.0 + 0.1 * jax.random.normal(k4, (R,), jnp.float32))
        return (gamma, beta, mean, var)

    branches = []
    # 1x1 conv, BN, ReLU
    w0 = 0.05 * jax.random.normal(keys[1], (R, Cin, 1, 1), jnp.float32)
    branches.append((1, 1, w0, bn_params(keys[2])))
    # 3x3 convs with dilation r, padding r, BN, ReLU
    for idx, r in enumerate(rates):
        wi = 0.05 * jax.random.normal(keys[3 + 2 * idx], (R, Cin, 3, 3),
                                      jnp.float32)
        branches.append((3, r, wi, bn_params(keys[4 + 2 * idx])))
    # image-pooling branch: 1x1 conv, BN, ReLU
    w_img = 0.05 * jax.random.normal(keys[10], (R, Cin, 1, 1), jnp.float32)
    params = {"branches": branches, "img": (w_img, bn_params(keys[11]))}

    out = jax.block_until_ready(aspp_forward(x_nchw, params))
    ref = jax.block_until_ready(ref_forward(x_nchw, params))

    assert out.shape == (N, 5 * R, H, W), out.shape
    out32 = out.astype(jnp.float32)
    err = float(jnp.max(jnp.abs(out32 - ref)))
    # bf16 output -> tolerance re-derived for 8-bit-mantissa rounding.
    assert jnp.allclose(out32, ref, rtol=2e-2, atol=2e-2), (
        "max abs err %g" % err)
    print("KERNEL_OK")
</pallas_src>

<mosaic_0001>
module attributes {stable_mosaic.version = 11 : i64} {
  func.func @_pool_img_kernel(%arg0: i32, %arg1: i32, %arg2: memref<1x16x16x128xbf16, #tpu.memory_space<vmem>>, %arg3: memref<128x128xf32, #tpu.memory_space<vmem>>, %arg4: memref<1x128xf32, #tpu.memory_space<vmem>>, %arg5: memref<1x1x128xf32, #tpu.memory_space<vmem>>, %arg6: memref<1x128xf32, #tpu.memory_space<vmem>>) attributes {dimension_semantics = [#tpu.dimension_semantics<parallel>, #tpu.dimension_semantics<arbitrary>], iteration_bounds = array<i64: 2, 1>, scalar_prefetch = 0 : i64, scratch_operands = 1 : i64, tpu.core_type = #tpu.core_type<tc>, window_params = [{transform_indices = @transform_0, window_bounds = array<i64: 1, 16, 16, 128>}, {pipeline_mode = #tpu.pipeline_mode<synchronous>, transform_indices = @transform_1, window_bounds = array<i64: 128, 128>}, {pipeline_mode = #tpu.pipeline_mode<synchronous>, transform_indices = @transform_2, window_bounds = array<i64: 1, 128>}, {transform_indices = @transform_3, window_bounds = array<i64: 1, 1, 128>}]} {
    %c0_i32 = arith.constant 0 : i32
    %0 = arith.cmpi eq, %arg1, %c0_i32 : i32
    %1 = arith.extui %0 : i1 to i32
    %c0_i32_0 = arith.constant 0 : i32
    %2 = arith.cmpi ne, %1, %c0_i32_0 : i32
    scf.if %2 {
      %cst_10 = arith.constant 0.000000e+00 : f32
      %14 = vector.broadcast %cst_10 : f32 to vector<1x128xf32>
      %c0_11 = arith.constant 0 : index
      %c0_12 = arith.constant 0 : index
      %15 = vector.load %arg6[%c0_11, %c0_12] : memref<1x128xf32, #tpu.memory_space<vmem>>, vector<1x128xf32>
      tpu.vector_store %arg6[%c0_11, %c0_12], %14 {strides = array<i32>} : memref<1x128xf32, #tpu.memory_space<vmem>>, vector<1x128xf32>,
    } else {
    }
    %c0 = arith.constant 0 : index
    %c0_1 = arith.constant 0 : index
    %c0_2 = arith.constant 0 : index
    %c0_3 = arith.constant 0 : index
    %3 = vector.load %arg2[%c0, %c0_1, %c0_2, %c0_3] : memref<1x16x16x128xbf16, #tpu.memory_space<vmem>>, vector<1x16x16x128xbf16>
    %4 = vector.shape_cast %3 : vector<1x16x16x128xbf16> to vector<16x16x128xbf16>
    %5 = arith.extf %4 : vector<16x16x128xbf16> to vector<16x16x128xf32>
    %c0_4 = arith.constant 0 : index
    %c0_5 = arith.constant 0 : index
    %6 = vector.load %arg6[%c0_4, %c0_5] : memref<1x128xf32, #tpu.memory_space<vmem>>, vector<1x128xf32>
    %cst = arith.constant dense<0.000000e+00> : vector<128xf32>
    %7 = vector.multi_reduction <add>, %5, %cst [0, 1] : vector<16x16x128xf32> to vector<128xf32>
    %8 = vector.shape_cast %7 : vector<128xf32> to vector<1x128xf32>
    %9 = arith.addf %6, %8 : vector<1x128xf32>
    %c0_6 = arith.constant 0 : index
    %c0_7 = arith.constant 0 : index
    %10 = vector.load %arg6[%c0_6, %c0_7] : memref<1x128xf32, #tpu.memory_space<vmem>>, vector<1x128xf32>
    tpu.vector_store %arg6[%c0_6, %c0_7], %9 {strides = array<i32>} : memref<1x128xf32, #tpu.memory_space<vmem>>, vector<1x128xf32>,
    %c0_i32_8 = arith.constant 0 : i32
    %11 = arith.cmpi eq, %arg1, %c0_i32_8 : i32
    %12 = arith.extui %11 : i1 to i32
    %c0_i32_9 = arith.constant 0 : i32
    %13 = arith.cmpi ne, %12, %c0_i32_9 : i32
    scf.if %13 {
      %c0_10 = arith.constant 0 : index
      %c0_11 = arith.constant 0 : index
      %14 = vector.load %arg6[%c0_10, %c0_11] : memref<1x128xf32, #tpu.memory_space<vmem>>, vector<1x128xf32>
      %cst_12 = arith.constant 3.906250e-03 : f32
      %15 = vector.broadcast %cst_12 : f32 to vector<1x128xf32>
      %16 = arith.mulf %14, %15 : vector<1x128xf32>
      %c0_13 = arith.constant 0 : index
      %c0_14 = arith.constant 0 : index
      %17 = vector.load %arg3[%c0_13, %c0_14] : memref<128x128xf32, #tpu.memory_space<vmem>>, vector<128x128xf32>
      %cst_15 = arith.constant dense<0.000000e+00> : vector<1x128xf32>
      %18 = tpu.matmul %16, %17, %cst_15 {dimension_numbers = #tpu.dot_dimension_numbers<[1], [0], [0], [1], [0, 0, 1, 1], [], []>} : vector<1x128xf32>, vector<128x128xf32>, vector<1x128xf32> -> vector<1x128xf32>
      %c0_16 = arith.constant 0 : index
      %c0_17 = arith.constant 0 : index
      %19 = vector.load %arg4[%c0_16, %c0_17] : memref<1x128xf32, #tpu.memory_space<vmem>>, vector<1x128xf32>
      %20 = arith.addf %18, %19 : vector<1x128xf32>
      %cst_18 = arith.constant 0.000000e+00 : f32
      %21 = vector.broadcast %cst_18 : f32 to vector<1x128xf32>
      %22 = arith.maximumf %20, %21 : vector<1x128xf32>
      %23 = vector.shape_cast %22 : vector<1x128xf32> to vector<1x1x128xf32>
      %c0_19 = arith.constant 0 : index
      %c0_20 = arith.constant 0 : index
      %c0_21 = arith.constant 0 : index
      %24 = vector.load %arg5[%c0_19, %c0_20, %c0_21] : memref<1x1x128xf32, #tpu.memory_space<vmem>>, vector<1x1x128xf32>
      tpu.vector_store %arg5[%c0_19, %c0_20, %c0_21], %23 {strides = array<i32>} : memref<1x1x128xf32, #tpu.memory_space<vmem>>, vector<1x1x128xf32>,
    } else {
    }
    return
  }
  func.func @transform_0(%arg0: i32, %arg1: i32) -> (i32, i32, i32, i32) {
    %c0_i32 = arith.constant 0 : i32
    %c0_i32_0 = arith.constant 0 : i32
    %c0_i32_1 = arith.constant 0 : i32
    return %arg0, %arg1, %c0_i32, %c0_i32_0 : i32, i32, i32, i32
  }
  func.func @transform_1(%arg0: i32, %arg1: i32) -> (i32, i32) {
    %c0_i32 = arith.constant 0 : i32
    %c0_i32_0 = arith.constant 0 : i32
    %c0_i32_1 = arith.constant 0 : i32
    return %c0_i32, %c0_i32_0 : i32, i32
  }
  func.func @transform_2(%arg0: i32, %arg1: i32) -> (i32, i32) {
    %c0_i32 = arith.constant 0 : i32
    %c0_i32_0 = arith.constant 0 : i32
    %c0_i32_1 = arith.constant 0 : i32
    return %c0_i32, %c0_i32_0 : i32, i32
  }
  func.func @transform_3(%arg0: i32, %arg1: i32) -> (i32, i32, i32) {
    %c0_i32 = arith.constant 0 : i32
    %c0_i32_0 = arith.constant 0 : i32
    %c0_i32_1 = arith.constant 0 : i32
    return %arg0, %c0_i32, %c0_i32_0 : i32, i32, i32
  }
}

</mosaic_0001>

<llo_original>
// kernel: tpu_custom_call.1
$region0: #{tpu_custom_call.1}
  #allocation0 [shape = 'u32[]', space=smem, size = 0x4, offset = 0x4, fixed_abs, tag = 'smem constant byte address 0x4 - core index']
  #allocation1 [shape = 'u32[144,128]{1,0:T(1,128)}', space=vmem, size = 0x12000, scoped, tag = 'internal scratch']
  #allocation2 [shape = 'f32[1,128]{1,0:T(1,128)}', space=vmem, size = 0x200, scoped, tag = 'scratch operand']
  %s0 = inlined_call_operand.hbm [shape: bf16[2,16,16,128], index: 0, kind: input, shape index: {}]
  %s1 = inlined_call_operand.hbm [shape: f32[128,128], index: 1, kind: input, shape index: {}]
  %s2 = inlined_call_operand.vmem [shape: f32[1,128], index: 2, kind: input, shape index: {}]
  %s3 = inlined_call_operand.hbm [shape: f32[2,1,128], index: 3, kind: output, shape index: {}]
  %s4 = sld [smem:[#allocation0]]
  $region61: #{tpu_custom_call.1} parent=0
    _
  %s6 = ssub.s32 1, %s4
  %s7 = scalar_select 0, %s6, %s4
  $region1: #{tpu_custom_call.1} parent=0
    #allocation3 [shape = 'u8[131072]{0}', space=vmem, size = 0x20000, scoped, tag = 'input window, operand 0']
    #allocation4 [shape = 's32[2]{0}', space=sflag, size = 0x8, scoped, tag = 'scoped memory for tpu_custom_call.1']
    #allocation5 [shape = 's32[2]{0}', space=sflag, size = 0x8, scoped, tag = 'scoped memory for tpu_custom_call.1']
    #allocation6 [shape = 'u8[65536]{0}', space=vmem, size = 0x10000, scoped, tag = 'input window, operand 1, single buffered']
    #allocation7 [shape = 's32[1]{0}', space=sflag, size = 0x4, scoped, tag = 'scoped memory for tpu_custom_call.1']
    #allocation8 [shape = 'u8[1024]{0}', space=vmem, size = 0x400, scoped, tag = 'output window, operand 0']
    %8 = vsyncpa [#allocation4], 0
    %s9 = scalar_lea.sflag [#allocation4], 1
    %10 = vsyncpa %s9, 0
    %11 = vsyncpa [#allocation7], 0
    %12 = vsyncpa [#allocation5], 0
    %s13 = scalar_lea.sflag [#allocation5], 1
    %14 = vsyncpa %s13, 0
    loop: start=0, step=1, limit=4
    $region2: #{tpu_custom_call.1} parent=1 // loop_pre_header
      _
    $region3: #{tpu_custom_call.1} parent=1 // loop_header
      %s16 = sphi 0, %s20
      %p17 = scmp.ge.s32.totalorder %s16, 4
      %s23 = sphi 0, %s35
      %s24 = sphi 0, %s31
      %s25 = sphi 0, %s23
      %s26 = sphi 0, %s24
      %s27 = sphi 0, %s25
      %s28 = sphi 0, %s26
      %s40 = sphi 0, %s42
      %s43 = sphi 0, %s40
      %s44 = sphi 0, %s43
      %s60 = sphi 0, %s44
      %s64 = sphi 0, %s64
      %s66 = sphi 0, %s64
      %s67 = sphi 0, %s66
      %s81 = sphi 0, %s67
      %s85 = sphi 0, %s85
      %s87 = sphi 0, %s85
      %s88 = sphi 0, %s87
      %s102 = sphi 0, %s88
      %s108 = sphi 0, %s110
      %s111 = sphi 0, %s108
      %s112 = sphi 0, %s111
      %s128 = sphi 0, %s112
    $region4: #{tpu_custom_call.1} parent=1 // loop_header_branch
      %19 = sbr.rel (%p17) target = $region8
    $region5: #{tpu_custom_call.1} parent=1 // loop_body
      %s21 = ssub.s32 %s16, 1
      %s22 = ssub.s32 %s16, 2
      %s29 = sadd.s32 1, %s24
      %p30 = scmp.ge.s32.totalorder %s29, 1
      %s31 = scalar_select %p30, 0, %s29
      %s32 = sadd.s32 1, %s23
      %s33 = scalar_select %p30, %s32, %s23
      %p34 = scmp.ge.s32.totalorder %s33, 2
      %s35 = scalar_select %p34, 0, %s33
      %s36 = ssub.s32 %s23, %s35
      %s37 = ssub.s32 %s24, %s31
      %s38 = sor.u32 %s36, %s37
      %p39 = scmp.eq.s32.totalorder %s38, 0
      %s41 = sadd.s32 %s40, 1
      %s42 = scalar_select %p39, %s40, %s41
      %p45 = pneg %p39
      %p46 = scmp.eq.s32.totalorder %s16, 1
      %p47 = por %p45, %p46
      %p48 = scmp.ne.s32.totalorder %s40, %s43
      %p49 = scmp.eq.s32.totalorder %s16, 0
      %p50 = por %p48, %p49
      %p51 = scmp.ne.s32.totalorder %s40, %s43
      %p52 = scmp.eq.s32.totalorder %s21, 1
      %p53 = por %p51, %p52
      %p54 = scmp.ne.s32.totalorder %s43, %s44
      %p55 = scmp.eq.s32.totalorder %s21, 0
      %p56 = por %p54, %p55
      %p57 = scmp.ne.s32.totalorder %s43, %s44
      %p58 = scmp.eq.s32.totalorder %s22, 1
      %p59 = por %p57, %p58
      %p61 = scmp.ne.s32.totalorder %s44, %s60
      %p62 = scmp.eq.s32.totalorder %s22, 0
      %p63 = por %p61, %p62
      %s65 = sadd.s32 %s64, 1
      %p68 = scmp.eq.s32.totalorder %s16, 1
      %p69 = scmp.ne.s32.totalorder %s64, %s66
      %p70 = scmp.eq.s32.totalorder %s16, 0
      %p71 = por %p69, %p70
      %p72 = scmp.ne.s32.totalorder %s64, %s66
      %p73 = scmp.eq.s32.totalorder %s21, 1
      %p74 = por %p72, %p73
      %p75 = scmp.ne.s32.totalorder %s66, %s67
      %p76 = scmp.eq.s32.totalorder %s21, 0
      %p77 = por %p75, %p76
      %p78 = scmp.ne.s32.totalorder %s66, %s67
      %p79 = scmp.eq.s32.totalorder %s22, 1
      %p80 = por %p78, %p79
      %p82 = scmp.ne.s32.totalorder %s67, %s81
      %p83 = scmp.eq.s32.totalorder %s22, 0
      %p84 = por %p82, %p83
      %s86 = sadd.s32 %s85, 1
      %p89 = scmp.eq.s32.totalorder %s16, 1
      %p90 = scmp.ne.s32.totalorder %s85, %s87
      %p91 = scmp.eq.s32.totalorder %s16, 0
      %p92 = por %p90, %p91
      %p93 = scmp.ne.s32.totalorder %s85, %s87
      %p94 = scmp.eq.s32.totalorder %s21, 1
      %p95 = por %p93, %p94
      %p96 = scmp.ne.s32.totalorder %s87, %s88
      %p97 = scmp.eq.s32.totalorder %s21, 0
      %p98 = por %p96, %p97
      %p99 = scmp.ne.s32.totalorder %s87, %s88
      %p100 = scmp.eq.s32.totalorder %s22, 1
      %p101 = por %p99, %p100
      %p103 = scmp.ne.s32.totalorder %s88, %s102
      %p104 = scmp.eq.s32.totalorder %s22, 0
      %p105 = por %p103, %p104
      %s106 = ssub.s32 %s23, %s35
      %p107 = scmp.eq.s32.totalorder %s106, 0
      %s109 = sadd.s32 %s108, 1
      %s110 = scalar_select %p107, %s108, %s109
      %p113 = pneg %p107
      %p114 = scmp.eq.s32.totalorder %s16, 1
      %p115 = por %p113, %p114
      %p116 = scmp.ne.s32.totalorder %s108, %s111
      %p117 = scmp.eq.s32.totalorder %s16, 0
      %p118 = por %p116, %p117
      %p119 = scmp.ne.s32.totalorder %s108, %s111
      %p120 = scmp.eq.s32.totalorder %s21, 1
      %p121 = por %p119, %p120
      %p122 = scmp.ne.s32.totalorder %s111, %s112
      %p123 = scmp.eq.s32.totalorder %s21, 0
      %p124 = por %p122, %p123
      %p125 = scmp.ne.s32.totalorder %s111, %s112
      %p126 = scmp.eq.s32.totalorder %s22, 1
      %p127 = por %p125, %p126
      %p129 = scmp.ne.s32.totalorder %s112, %s128
      %p130 = scmp.eq.s32.totalorder %s22, 0
      %p131 = por %p129, %p130
      %p132 = scmp.le.s32.totalorder 1, %s16
      %p133 = scmp.lt.s32.totalorder %s16, 3
      %p134 = pnand %p132, %p133
      %p135 = pneg %p134
      // Predicated region
      $region9: #{tpu_custom_call.1} parent=5 // pred_check
        _
      $region10: #{tpu_custom_call.1} parent=5 // pred_check_branch
        %137 = sbr.rel (%p134) target = $region12
      $region11: #{tpu_custom_call.1} parent=5 // pred_region
        %s138 = ssub.s32 %s16, 1
        // Predicated region
        $region13: #{tpu_custom_call.1} parent=11 // pred_check
          %p139 = pneg %p77
        $region14: #{tpu_custom_call.1} parent=11 // pred_check_branch
          %141 = sbr.rel (%p139) target = $region16
        $region15: #{tpu_custom_call.1} parent=11 // pred_region
          %s143 = ssub.s32 2048, 2048
          %144 = vsyncadd [#allocation7], %s143
          %s145 = sshll.u32 [#allocation6], 4
          %s146 = int_to_ptr.vmem [resolvable:$true] %s145
          %151 = dma.hbm_to_vmem [thread:$0]  %s1, 2048, %s146, [#allocation7], 128, 128, 8
        $region16: #{tpu_custom_call.1} parent=11 // pred_fallthru
          _
        // Predicated region
        $region17: #{tpu_custom_call.1} parent=11 // pred_check
          %p152 = pneg %p98
        $region18: #{tpu_custom_call.1} parent=11 // pred_check_branch
          %154 = sbr.rel (%p152) target = $region20
        $region19: #{tpu_custom_call.1} parent=11 // pred_region
          _
        $region20: #{tpu_custom_call.1} parent=11 // pred_fallthru
          _
      $region12: #{tpu_custom_call.1} parent=5 // pred_fallthru
        _
      %p155 = scmp.lt.s32.totalorder %s16, 2
      // Predicated region
      $region21: #{tpu_custom_call.1} parent=5 // pred_check
        %p156 = pneg %p155
      $region22: #{tpu_custom_call.1} parent=5 // pred_check_branch
        %158 = sbr.rel (%p156) target = $region24
      $region23: #{tpu_custom_call.1} parent=5 // pred_region
        // Predicated region
        $region25: #{tpu_custom_call.1} parent=23 // pred_check
          %p159 = pneg %p50
        $region26: #{tpu_custom_call.1} parent=23 // pred_check_branch
          %161 = sbr.rel (%p159) target = $region28
        $region27: #{tpu_custom_call.1} parent=23 // pred_region
          %s162 = sand.u32 %s40, 1
          %s163 = scalar_lea.sflag [#allocation4], %s162
          %s164 = sand.u32 %s40, 1
          %s165 = smul.addr %s164, 128
          %s166 = scalar_lea.vmem [#allocation3], %s165
          %s167 = smul.u32 16, %s24
          %s169 = ssub.s32 2048, 2048
          %170 = vsyncadd %s163, %s169
          %s171 = smul.addr %s167, 2
          %s172 = smul.addr %s23, 32
          %s173 = sadd.s32 %s171, %s172
          %s174 = smul.addr %s173, 64
          %s175 = scalar_lea.hbm %s0, %s174
          %s176 = sshll.u32 %s166, 4
          %s177 = int_to_ptr.vmem [resolvable:$true] %s176
          %182 = dma.hbm_to_vmem [thread:$0]  %s175, 2048, %s177, %s163, 64, 64, 4
        $region28: #{tpu_custom_call.1} parent=23 // pred_fallthru
          _
      $region24: #{tpu_custom_call.1} parent=5 // pred_fallthru
        _
      %p183 = scmp.le.s32.totalorder 1, %s16
      %p184 = scmp.lt.s32.totalorder %s16, 3
      %p185 = pnand %p183, %p184
      %p186 = pneg %p185
      // Predicated region
      $region29: #{tpu_custom_call.1} parent=5 // pred_check
        _
      $region30: #{tpu_custom_call.1} parent=5 // pred_check_branch
        %188 = sbr.rel (%p185) target = $region32
      $region31: #{tpu_custom_call.1} parent=5 // pred_region
        %s189 = ssub.s32 %s16, 1
        %s190 = sand.u32 %s43, 1
        %s191 = scalar_lea.sflag [#allocation4], %s190
        %s192 = sand.u32 %s43, 1
        %s193 = smul.addr %s192, 128
        %s194 = scalar_lea.vmem [#allocation3], %s193
        // Predicated region
        $region33: #{tpu_custom_call.1} parent=31 // pred_check
          %p195 = pneg %p56
        $region34: #{tpu_custom_call.1} parent=31 // pred_check_branch
          %197 = sbr.rel (%p195) target = $region36
        $region35: #{tpu_custom_call.1} parent=31 // pred_region
          %198 = dma.done %s191, 2048
        $region36: #{tpu_custom_call.1} parent=31 // pred_fallthru
          _
        // Predicated region
        $region37: #{tpu_custom_call.1} parent=31 // pred_check
          %p199 = pneg %p77
        $region38: #{tpu_custom_call.1} parent=31 // pred_check_branch
          %201 = sbr.rel (%p199) target = $region40
        $region39: #{tpu_custom_call.1} parent=31 // pred_region
          %202 = dma.done [#allocation7], 2048
        $region40: #{tpu_custom_call.1} parent=31 // pred_fallthru
          _
        %s203 = sand.u32 %s43, 1
        %s204 = scalar_lea.sflag [#allocation4], %s203
        %s205 = sand.u32 %s43, 1
        %s206 = smul.addr %s205, 128
        %s207 = scalar_lea.vmem [#allocation3], %s206
        %p208 = pneg %p56
        %p209 = pneg %p53
        %p210 = pneg %p77
        %p211 = pneg %p74
        %p212 = pneg %p98
        %p213 = pneg %p95
        %p214 = pneg %p124
        %p215 = pneg %p121
        %s216 = sand.u32 %s111, 1
        %s217 = scalar_lea.sflag [#allocation5], %s216
        %s218 = sand.u32 %s111, 1
        %s219 = scalar_lea.vmem [#allocation8], %s218
        %s220 = smul.u32 16, %s26
        %p221 = scmp.eq.s32.totalorder %s26, 0
        // Predicated region
        $region41: #{tpu_custom_call.1} parent=31 // pred_check
          %p222 = pneg %p221
        $region42: #{tpu_custom_call.1} parent=31 // pred_check_branch
          %224 = sbr.rel (%p222) target = $region44
        $region43: #{tpu_custom_call.1} parent=31 // pred_region
          %225 = vst [vmem:[#allocation2] sm:$0x1] 0.0
        $region44: #{tpu_custom_call.1} parent=31 // pred_fallthru
          _
        %v226 = vld [vmem:[%s194] sm:$0xf]
        %v227 = vld [vmem:[%s194 + $0x4] sm:$0xf]
        %v228 = vld [vmem:[%s194 + $0x8] sm:$0xf]
        %v229 = vld [vmem:[%s194 + $0xc] sm:$0xf]
        %v230 = vld [vmem:[%s194 + $0x10] sm:$0xf]
        %v231 = vld [vmem:[%s194 + $0x14] sm:$0xf]
        %v232 = vld [vmem:[%s194 + $0x18] sm:$0xf]
        %v233 = vld [vmem:[%s194 + $0x1c] sm:$0xf]
        %v234 = vld [vmem:[%s194 + $0x20] sm:$0xf]
        %v235 = vld [vmem:[%s194 + $0x24] sm:$0xf]
        %v236 = vld [vmem:[%s194 + $0x28] sm:$0xf]
        %v237 = vld [vmem:[%s194 + $0x2c] sm:$0xf]
        %v238 = vld [vmem:[%s194 + $0x30] sm:$0xf]
        %v239 = vld [vmem:[%s194 + $0x34] sm:$0xf]
        %v240 = vld [vmem:[%s194 + $0x38] sm:$0xf]
        %v241 = vld [vmem:[%s194 + $0x3c] sm:$0xf]
        %v242 = vld [vmem:[%s194 + $0x40] sm:$0xf]
        %v243 = vld [vmem:[%s194 + $0x44] sm:$0xf]
        %v244 = vld [vmem:[%s194 + $0x48] sm:$0xf]
        %v245 = vld [vmem:[%s194 + $0x4c] sm:$0xf]
        %v246 = vld [vmem:[%s194 + $0x50] sm:$0xf]
        %v247 = vld [vmem:[%s194 + $0x54] sm:$0xf]
        %v248 = vld [vmem:[%s194 + $0x58] sm:$0xf]
        %v249 = vld [vmem:[%s194 + $0x5c] sm:$0xf]
        %v250 = vld [vmem:[%s194 + $0x60] sm:$0xf]
        %v251 = vld [vmem:[%s194 + $0x64] sm:$0xf]
        %v252 = vld [vmem:[%s194 + $0x68] sm:$0xf]
        %v253 = vld [vmem:[%s194 + $0x6c] sm:$0xf]
        %v254 = vld [vmem:[%s194 + $0x70] sm:$0xf]
        %v255 = vld [vmem:[%s194 + $0x74] sm:$0xf]
        %v256 = vld [vmem:[%s194 + $0x78] sm:$0xf]
        %v257 = vld [vmem:[%s194 + $0x7c] sm:$0xf]
        %v258 = vunpack.c.l.bf16 %v226
        %v259 = vunpack.c.l.bf16 %v227
        %v260 = vunpack.c.l.bf16 %v228
        %v261 = vunpack.c.l.bf16 %v229
        %v262 = vunpack.c.l.bf16 %v230
        %v263 = vunpack.c.l.bf16 %v231
        %v264 = vunpack.c.l.bf16 %v232
        %v265 = vunpack.c.l.bf16 %v233
        %v266 = vunpack.c.l.bf16 %v234
        %v267 = vunpack.c.l.bf16 %v235
        %v268 = vunpack.c.l.bf16 %v236
        %v269 = vunpack.c.l.bf16 %v237
        %v270 = vunpack.c.l.bf16 %v238
        %v271 = vunpack.c.l.bf16 %v239
        %v272 = vunpack.c.l.bf16 %v240
        %v273 = vunpack.c.l.bf16 %v241
        %v274 = vunpack.c.l.bf16 %v242
        %v275 = vunpack.c.l.bf16 %v243
        %v276 = vunpack.c.l.bf16 %v244
        %v277 = vunpack.c.l.bf16 %v245
        %v278 = vunpack.c.l.bf16 %v246
        %v279 = vunpack.c.l.bf16 %v247
        %v280 = vunpack.c.l.bf16 %v248
        %v281 = vunpack.c.l.bf16 %v249
        %v282 = vunpack.c.l.bf16 %v250
        %v283 = vunpack.c.l.bf16 %v251
        %v284 = vunpack.c.l.bf16 %v252
        %v285 = vunpack.c.l.bf16 %v253
        %v286 = vunpack.c.l.bf16 %v254
        %v287 = vunpack.c.l.bf16 %v255
        %v288 = vunpack.c.l.bf16 %v256
        %v289 = vunpack.c.l.bf16 %v257
        %v290 = vld [vmem:[#allocation2] sm:$0x1]
        %v291 = vadd.f32 %v258, %v259
        %v292 = vadd.f32 %v291, %v260
        %v293 = vadd.f32 %v292, %v261
        %v294 = vadd.f32 %v293, %v262
        %v295 = vadd.f32 %v294, %v263
        %v296 = vadd.f32 %v295, %v264
        %v297 = vadd.f32 %v296, %v265
        %v298 = vadd.f32 %v297, %v266
        %v299 = vadd.f32 %v298, %v267
        %v300 = vadd.f32 %v299, %v268
        %v301 = vadd.f32 %v300, %v269
        %v302 = vadd.f32 %v301, %v270
        %v303 = vadd.f32 %v302, %v271
        %v304 = vadd.f32 %v303, %v272
        %v305 = vadd.f32 %v304, %v273
        %v306 = vadd.f32 %v305, %v274
        %v307 = vadd.f32 %v306, %v275
        %v308 = vadd.f32 %v307, %v276
        %v309 = vadd.f32 %v308, %v277
        %v310 = vadd.f32 %v309, %v278
        %v311 = vadd.f32 %v310, %v279
        %v312 = vadd.f32 %v311, %v280
        %v313 = vadd.f32 %v312, %v281
        %v314 = vadd.f32 %v313, %v282
        %v315 = vadd.f32 %v314, %v283
        %v316 = vadd.f32 %v315, %v284
        %v317 = vadd.f32 %v316, %v285
        %v318 = vadd.f32 %v317, %v286
        %v319 = vadd.f32 %v318, %v287
        %v320 = vadd.f32 %v319, %v288
        %v321 = vadd.f32 %v320, %v289
        %v322 = vrot.slane %v321, 4
        %v323 = vadd.f32 %v321, %v322
        %v324 = vrot.slane %v323, 2
        %v325 = vadd.f32 %v323, %v324
        %v326 = vrot.slane %v325, 1
        %v327 = vadd.f32 %v325, %v326
        %v328 = vadd.f32 %v290, %v327
        %329 = vst [vmem:[#allocation2] sm:$0x1] %v328
        // Predicated region
        $region45: #{tpu_custom_call.1} parent=31 // pred_check
          %p330 = pneg %p221
        $region46: #{tpu_custom_call.1} parent=31 // pred_check_branch
          %332 = sbr.rel (%p330) target = $region48
        $region47: #{tpu_custom_call.1} parent=31 // pred_region
          %v333 = vld [vmem:[#allocation2] sm:$0x1]
          %v334 = vmul.f32 %v333, 0.00390625
          %v335 = vld [vmem:[#allocation6] sm:$0xff]
          %v336 = vld [vmem:[#allocation6 + $0x8] sm:$0xff]
          %v337 = vld [vmem:[#allocation6 + $0x10] sm:$0xff]
          %v338 = vld [vmem:[#allocation6 + $0x18] sm:$0xff]
          %v339 = vld [vmem:[#allocation6 + $0x20] sm:$0xff]
          %v340 = vld [vmem:[#allocation6 + $0x28] sm:$0xff]
          %v341 = vld [vmem:[#allocation6 + $0x30] sm:$0xff]
          %v342 = vld [vmem:[#allocation6 + $0x38] sm:$0xff]
          %v343 = vld [vmem:[#allocation6 + $0x40] sm:$0xff]
          %v344 = vld [vmem:[#allocation6 + $0x48] sm:$0xff]
          %v345 = vld [vmem:[#allocation6 + $0x50] sm:$0xff]
          %v346 = vld [vmem:[#allocation6 + $0x58] sm:$0xff]
          %v347 = vld [vmem:[#allocation6 + $0x60] sm:$0xff]
          %v348 = vld [vmem:[#allocation6 + $0x68] sm:$0xff]
          %v349 = vld [vmem:[#allocation6 + $0x70] sm:$0xff]
          %v350 = vld [vmem:[#allocation6 + $0x78] sm:$0xff]
          %v351 = vld [vmem:[%s2] sm:$0x1]
          %352 = vmatprep.subr.mxu0 0.0
          %353 = vmatpush1.msra.mxu0 %v350
          %354 = vmatprep.subr.mxu0 0.0
          %355 = vmatpush1.msra.mxu0 %v349
          %356 = vmatprep.subr.mxu0 0.0
          %357 = vmatpush1.msra.mxu0 %v348
          %358 = vmatprep.subr.mxu0 0.0
          %359 = vmatpush1.msra.mxu0 %v347
          %360 = vmatprep.subr.mxu0 0.0
          %361 = vmatpush1.msra.mxu0 %v346
          %362 = vmatprep.subr.mxu0 0.0
          %363 = vmatpush1.msra.mxu0 %v345
          %364 = vmatprep.subr.mxu0 0.0
          %365 = vmatpush1.msra.mxu0 %v344
          %366 = vmatprep.subr.mxu0 0.0
          %367 = vmatpush1.msra.mxu0 %v343
          %368 = vmatprep.subr.mxu0 0.0
          %369 = vmatpush1.msra.mxu0 %v342
          %370 = vmatprep.subr.mxu0 0.0
          %371 = vmatpush1.msra.mxu0 %v341
          %372 = vmatprep.subr.mxu0 0.0
          %373 = vmatpush1.msra.mxu0 %v340
          %374 = vmatprep.subr.mxu0 0.0
          %375 = vmatpush1.msra.mxu0 %v339
          %376 = vmatprep.subr.mxu0 0.0
          %377 = vmatpush1.msra.mxu0 %v338
          %378 = vmatprep.subr.mxu0 0.0
          %379 = vmatpush1.msra.mxu0 %v337
          %380 = vmatprep.subr.mxu0 0.0
          %381 = vmatpush1.msra.mxu0 %v336
          %382 = vmatprep.subr.mxu0 0.0
          %383 = vmatpush1.msra.mxu0 %v335
          %384 = vmatprep.subr.mxu0 0.0
          %385 = vmatpush2.msra.mxu0 0.0
          %386 = vmatprep.subr.mxu0 0.0
          %387 = vmatpush2.msra.mxu0 0.0
          %388 = vmatprep.subr.mxu0 0.0
          %389 = vmatpush2.msra.mxu0 0.0
          %390 = vmatprep.subr.mxu0 0.0
          %391 = vmatpush2.msra.mxu0 0.0
          %392 = vmatprep.subr.mxu0 0.0
          %393 = vmatpush2.msra.mxu0 0.0
          %394 = vmatprep.subr.mxu0 0.0
          %395 = vmatpush2.msra.mxu0 0.0
          %396 = vmatprep.subr.mxu0 0.0
          %397 = vmatpush2.msra.mxu0 0.0
          %398 = vmatprep.subr.mxu0 0.0
          %399 = vmatpush2.msra.mxu0 0.0
          %400 = vmatprep.subr.mxu0 0.0
          %401 = vmatpush2.msra.mxu0 0.0
          %402 = vmatprep.subr.mxu0 0.0
          %403 = vmatpush2.msra.mxu0 0.0
          %404 = vmatprep.subr.mxu0 0.0
          %405 = vmatpush2.msra.mxu0 0.0
          %406 = vmatprep.subr.mxu0 0.0
          %407 = vmatpush2.msra.mxu0 0.0
          %408 = vmatprep.subr.mxu0 0.0
          %409 = vmatpush2.msra.mxu0 0.0
          %410 = vmatprep.subr.mxu0 0.0
          %411 = vmatpush2.msra.mxu0 0.0
          %412 = vmatprep.subr.mxu0 0.0
          %413 = vmatpush2.msra.mxu0 0.0
          %414 = vmatprep.subr.mxu0 0.0
          %415 = vmatpush2.msra.mxu0 0.0
          %416 = vmatprep.mubr.f32.mxu0 0.0
          %417 = vmatmul.mubr.f32.gmra.mxu0 %v334
          %v418 = vpop.f32.mrf.mxu0
          %v419 = vadd.f32 %v351, %v418
          %v420 = vpop.f32.mrf.mxu0
          %421 = vdwg.mxu0
          %v422 = vmax.f32 %v419, 0.0
          %423 = vst [vmem:[%s219] sm:$0x1] %v422
        $region48: #{tpu_custom_call.1} parent=31 // pred_fallthru
          _
        %s424 = sand.u32 %s111, 1
        %s425 = scalar_lea.sflag [#allocation5], %s424
        %s426 = sand.u32 %s111, 1
        %s427 = scalar_lea.vmem [#allocation8], %s426
        // Predicated region
        $region49: #{tpu_custom_call.1} parent=31 // pred_check
          %p428 = pneg %p121
        $region50: #{tpu_custom_call.1} parent=31 // pred_check_branch
          %430 = sbr.rel (%p428) target = $region52
        $region51: #{tpu_custom_call.1} parent=31 // pred_region
          %s432 = ssub.s32 16, 16
          %433 = vsyncadd %s425, %s432
          %s434 = smul.addr %s25, 16
          %s435 = scalar_lea.hbm %s3, %s434
          %s437 = sshll.u32 %s427, 4
          %s438 = int_to_ptr.vmem [resolvable:$true] %s437
          %440 = dma.vmem_to_hbm [thread:$0]  %s438, 16, %s435, %s425
        $region52: #{tpu_custom_call.1} parent=31 // pred_fallthru
          _
      $region32: #{tpu_custom_call.1} parent=5 // pred_fallthru
        _
      %p441 = scmp.le.s32.totalorder 2, %s16
      // Predicated region
      $region53: #{tpu_custom_call.1} parent=5 // pred_check
        %p442 = pneg %p441
      $region54: #{tpu_custom_call.1} parent=5 // pred_check_branch
        %444 = sbr.rel (%p442) target = $region56
      $region55: #{tpu_custom_call.1} parent=5 // pred_region
        %s445 = ssub.s32 %s16, 2
        // Predicated region
        $region57: #{tpu_custom_call.1} parent=55 // pred_check
          %p446 = pneg %p127
        $region58: #{tpu_custom_call.1} parent=55 // pred_check_branch
          %448 = sbr.rel (%p446) target = $region60
        $region59: #{tpu_custom_call.1} parent=55 // pred_region
          %s449 = sand.u32 %s112, 1
          %s450 = scalar_lea.sflag [#allocation5], %s449
          %s451 = sand.u32 %s112, 1
          %s452 = scalar_lea.vmem [#allocation8], %s451
          %453 = dma.done %s450, 16
        $region60: #{tpu_custom_call.1} parent=55 // pred_fallthru
          _
      $region56: #{tpu_custom_call.1} parent=5 // pred_fallthru
        _
    $region6: #{tpu_custom_call.1} parent=1 // loop_footer
      %s20 = sadd.s32 1, %s16
    $region7: #{tpu_custom_call.1} parent=1 // loop_footer_branch
      %15 = sbr.rel target = $region3
    $region8: #{tpu_custom_call.1} parent=1 // loop_exit
      _
    %454 = vsyncpa [#allocation4], 1
    %s455 = scalar_lea.sflag [#allocation4], 1
    %456 = vsyncpa %s455, 1
    %457 = vsyncpa [#allocation7], 1
    %458 = vsyncpa [#allocation5], 1
    %s459 = scalar_lea.sflag [#allocation5], 1
    %460 = vsyncpa %s459, 1

</llo_original>
